<compile_context>
chip_gen: v5e
topology: v5e:2x2
jax: 0.10.0
libtpu: 0.0.40
codegen_flags: <defaults>
</compile_context>

<pallas_src>
import jax
import jax.numpy as jnp
from jax.experimental import pallas as pl
from jax.experimental.pallas import tpu as pltpu


_LANE = 512             # lane width of the flattened slab (multiple of 128)
_MAX_BLOCK_ROWS = 1024  # ~2 MiB f32 per input block at 512 lanes


def _cdiv(a, b):
    return -(-a // b)


def _round_up(a, b):
    return _cdiv(a, b) * b


def _mse_block_kernel(x_ref, t_ref, part_ref):
    # Upcast before the subtract for accuracy; the kernel is HBM-bound so the
    # extra f32 VPU width is free (a bf16 subtract on v6e/v7x buys nothing at
    # the bandwidth roofline).
    d = x_ref[...].astype(jnp.float32) - t_ref[...].astype(jnp.float32)
    s = jnp.sum(d * d)  # one reduce per (multi-MiB) block, hides under DMA
    part_ref[...] = jnp.full(part_ref.shape, s, dtype=jnp.float32)


def content_loss_forward(data, target, *, small_fallback_elements=0):
    """Mirrors ContentLoss.forward: returns (data, mse_loss(data, target))."""
    assert data.shape == target.shape, "mse_loss requires matching shapes here"
    total_n = data.size

    # Optional short-circuit: for tiny tensors a plain XLA fusion beats any
    # kernel-launch + grid overhead.  Disabled by default (=0) so callers that
    # want it can opt in; the demo below always exercises the Pallas path.
    if total_n <= small_fallback_elements:
        d = data.astype(jnp.float32) - target.astype(jnp.float32)
        return data, jnp.mean(d * d)

    itemsize = jnp.dtype(data.dtype).itemsize
    sublane_mult = max(8, 32 // itemsize)            # 8 f32 / 16 bf16 / 32 i8

    # Lane-dense padded slab: flatten -> zero-pad -> (rows_padded, _LANE).
    rows = _cdiv(total_n, _LANE)
    n_blocks = _cdiv(rows, _MAX_BLOCK_ROWS)          # parallel grid size
    row_blk = _round_up(_cdiv(rows, n_blocks), sublane_mult)
    rows_padded = n_blocks * row_blk
    padded_n = rows_padded * _LANE

    xf = data.reshape(-1)
    tf = target.reshape(-1)
    pad = padded_n - total_n
    if pad:
        # Zero padding on both operands contributes 0 to the squared error;
        # the mean divides by the true element count below.
        xf = jnp.pad(xf, (0, pad))
        tf = jnp.pad(tf, (0, pad))
    x2 = xf.reshape(rows_padded, _LANE)
    t2 = tf.reshape(rows_padded, _LANE)

    cost = pl.CostEstimate(
        flops=3 * padded_n,                          # sub + mul + add per elem
        transcendentals=0,
        bytes_accessed=2 * padded_n * itemsize + n_blocks * 8 * 128 * 4,
    )

    partials = pl.pallas_call(
        _mse_block_kernel,
        out_shape=jax.ShapeDtypeStruct((n_blocks, 8, 128), jnp.float32),
        grid_spec=pltpu.PrefetchScalarGridSpec(
            num_scalar_prefetch=0,
            grid=(n_blocks,),
            in_specs=[
                pl.BlockSpec((row_blk, _LANE), lambda i: (i, 0)),
                pl.BlockSpec((row_blk, _LANE), lambda i: (i, 0)),
            ],
            out_specs=pl.BlockSpec((1, 8, 128), lambda i: (i, 0, 0)),
        ),
        compiler_params=pltpu.CompilerParams(
            dimension_semantics=("parallel",),       # row blocks independent -> v7x 2 TCs
            vmem_limit_bytes=32 * 1024 * 1024,       # headroom on v5e/v6e, safe on v7x
        ),
        cost_estimate=cost,
    )(x2, t2)

    # Each block splatted its own partial sum; collapse the tiny partial array
    # and normalize by the true (unpadded) element count.
    loss = jnp.sum(partials[:, 0, 0]) / total_n

    # forward() returns `data` unchanged (identity); loss is the side output.
    return data, loss


if __name__ == "__main__":
    key = jax.random.PRNGKey(0)
    k_data, k_target = jax.random.split(key)

    # Small NCHW shapes consistent with the module's usage.
    shape = (2, 4, 16, 16)
    data = jax.random.normal(k_data, shape, dtype=jnp.float32)
    # `target` is a deterministic in-script tensor (module's __init__ arg).
    target = jax.random.normal(k_target, shape, dtype=jnp.float32)

    out, loss = content_loss_forward(data, target)
    out = jax.block_until_ready(out)
    loss = jax.block_until_ready(loss)

    # Reference check against plain-JAX MSE and identity pass-through.
    ref_loss = jnp.mean((data - target) ** 2)
    assert jnp.allclose(loss, ref_loss, rtol=1e-5, atol=1e-6), (loss, ref_loss)
    assert jnp.array_equal(out, data)

    print("KERNEL_OK")
</pallas_src>

<mosaic_0001>
module attributes {stable_mosaic.version = 11 : i64} {
  func.func @_mse_block_kernel(%arg0: i32, %arg1: memref<8x512xf32, #tpu.memory_space<vmem>>, %arg2: memref<8x512xf32, #tpu.memory_space<vmem>>, %arg3: memref<1x8x128xf32, #tpu.memory_space<vmem>>) attributes {dimension_semantics = [#tpu.dimension_semantics<parallel>], iteration_bounds = array<i64: 1>, scalar_prefetch = 0 : i64, scratch_operands = 0 : i64, tpu.core_type = #tpu.core_type<tc>, window_params = [{transform_indices = @transform_0, window_bounds = array<i64: 8, 512>}, {transform_indices = @transform_1, window_bounds = array<i64: 8, 512>}, {transform_indices = @transform_2, window_bounds = array<i64: 1, 8, 128>}]} {
    %c0 = arith.constant 0 : index
    %c0_0 = arith.constant 0 : index
    %0 = vector.load %arg1[%c0, %c0_0] : memref<8x512xf32, #tpu.memory_space<vmem>>, vector<8x512xf32>
    %c0_1 = arith.constant 0 : index
    %c0_2 = arith.constant 0 : index
    %1 = vector.load %arg2[%c0_1, %c0_2] : memref<8x512xf32, #tpu.memory_space<vmem>>, vector<8x512xf32>
    %2 = arith.subf %0, %1 : vector<8x512xf32>
    %3 = arith.mulf %2, %2 : vector<8x512xf32>
    %4 = vector.shape_cast %3 : vector<8x512xf32> to vector<1x8x512xf32>
    %cst = arith.constant dense<0.000000e+00> : vector<1xf32>
    %5 = vector.multi_reduction <add>, %4, %cst [1, 2] : vector<1x8x512xf32> to vector<1xf32>
    %6 = vector.shape_cast %5 : vector<1xf32> to vector<1x1x1xf32>
    %7 = vector.extract %6[0, 0, 0] : f32 from vector<1x1x1xf32>
    %8 = vector.broadcast %7 : f32 to vector<1x8x128xf32>
    %c0_3 = arith.constant 0 : index
    %c0_4 = arith.constant 0 : index
    %c0_5 = arith.constant 0 : index
    %9 = vector.load %arg3[%c0_3, %c0_4, %c0_5] : memref<1x8x128xf32, #tpu.memory_space<vmem>>, vector<1x8x128xf32>
    tpu.vector_store %arg3[%c0_3, %c0_4, %c0_5], %8 {strides = array<i32>} : memref<1x8x128xf32, #tpu.memory_space<vmem>>, vector<1x8x128xf32>,
    return
  }
  func.func @transform_0(%arg0: i32) -> (i32, i32) {
    %c0_i32 = arith.constant 0 : i32
    %c0_i32_0 = arith.constant 0 : i32
    return %arg0, %c0_i32 : i32, i32
  }
  func.func @transform_1(%arg0: i32) -> (i32, i32) {
    %c0_i32 = arith.constant 0 : i32
    %c0_i32_0 = arith.constant 0 : i32
    return %arg0, %c0_i32 : i32, i32
  }
  func.func @transform_2(%arg0: i32) -> (i32, i32, i32) {
    %c0_i32 = arith.constant 0 : i32
    %c0_i32_0 = arith.constant 0 : i32
    %c0_i32_1 = arith.constant 0 : i32
    return %arg0, %c0_i32, %c0_i32_0 : i32, i32, i32
  }
}

</mosaic_0001>

<llo_original>
// kernel: tpu_custom_call.1
$region0: #{tpu_custom_call.1}
  #allocation0 [shape = 'u32[]', space=smem, size = 0x4, offset = 0x4, fixed_abs, tag = 'smem constant byte address 0x4 - core index']
  #allocation1 [shape = 'u32[72,128]{1,0:T(1,128)}', space=vmem, size = 0x9000, scoped, tag = 'internal scratch']
  %s0 = inlined_call_operand.hbm [shape: f32[8,512], index: 0, kind: input, shape index: {}]
  %s1 = inlined_call_operand.hbm [shape: f32[8,512], index: 1, kind: input, shape index: {}]
  %s2 = inlined_call_operand.hbm [shape: f32[1,8,128], index: 2, kind: output, shape index: {}]
  %s3 = sld [smem:[#allocation0]]
  $region26: #{tpu_custom_call.1} parent=0
    _
  %s5 = ssub.s32 1, %s3
  %s6 = scalar_select 0, %s5, %s3
  $region1: #{tpu_custom_call.1} parent=0
    #allocation2 [shape = 'u8[16384]{0}', space=vmem, size = 0x4000, scoped, tag = 'input window, operand 0, single buffered']
    #allocation3 [shape = 's32[1]{0}', space=sflag, size = 0x4, scoped, tag = 'scoped memory for tpu_custom_call.1']
    #allocation4 [shape = 's32[1]{0}', space=sflag, size = 0x4, scoped, tag = 'scoped memory for tpu_custom_call.1']
    #allocation5 [shape = 'u8[16384]{0}', space=vmem, size = 0x4000, scoped, tag = 'input window, operand 1, single buffered']
    #allocation6 [shape = 's32[1]{0}', space=sflag, size = 0x4, scoped, tag = 'scoped memory for tpu_custom_call.1']
    #allocation7 [shape = 'u8[4096]{0}', space=vmem, size = 0x1000, scoped, tag = 'output window, operand 0, single buffered']
    %7 = vsyncpa [#allocation3], 0
    %8 = vsyncpa [#allocation6], 0
    %9 = vsyncpa [#allocation4], 0
    // Predicated region
    $region2: #{tpu_custom_call.1} parent=1 // pred_check
      _
    $region3: #{tpu_custom_call.1} parent=1 // pred_check_branch
      %11 = sbr.rel (0) target = $region5
    $region4: #{tpu_custom_call.1} parent=1 // pred_region
      %13 = vsyncadd [#allocation3], 0
      %s15 = sshll.u32 %s0, 4
      %s16 = int_to_ptr.hbm [resolvable:$true] %s15
      %s17 = sshll.u32 [#allocation2], 4
      %s18 = int_to_ptr.vmem [resolvable:$true] %s17
      %20 = dma.hbm_to_vmem [thread:$0]  %s16, 512, %s18, [#allocation3]
    $region5: #{tpu_custom_call.1} parent=1 // pred_fallthru
      _
    // Predicated region
    $region6: #{tpu_custom_call.1} parent=1 // pred_check
      _
    $region7: #{tpu_custom_call.1} parent=1 // pred_check_branch
      %22 = sbr.rel (0) target = $region9
    $region8: #{tpu_custom_call.1} parent=1 // pred_region
      %24 = vsyncadd [#allocation6], 0
      %s26 = sshll.u32 %s1, 4
      %s27 = int_to_ptr.hbm [resolvable:$true] %s26
      %s28 = sshll.u32 [#allocation5], 4
      %s29 = int_to_ptr.vmem [resolvable:$true] %s28
      %31 = dma.hbm_to_vmem [thread:$0]  %s27, 512, %s29, [#allocation6]
    $region9: #{tpu_custom_call.1} parent=1 // pred_fallthru
      _
    // Predicated region
    $region10: #{tpu_custom_call.1} parent=1 // pred_check
      _
    $region11: #{tpu_custom_call.1} parent=1 // pred_check_branch
      %33 = sbr.rel (0) target = $region13
    $region12: #{tpu_custom_call.1} parent=1 // pred_region
      %35 = dma.done [#allocation3], 512
    $region13: #{tpu_custom_call.1} parent=1 // pred_fallthru
      _
    // Predicated region
    $region14: #{tpu_custom_call.1} parent=1 // pred_check
      _
    $region15: #{tpu_custom_call.1} parent=1 // pred_check_branch
      %37 = sbr.rel (0) target = $region17
    $region16: #{tpu_custom_call.1} parent=1 // pred_region
      %39 = dma.done [#allocation6], 512
    $region17: #{tpu_custom_call.1} parent=1 // pred_fallthru
      _
    %v40 = vld [vmem:[#allocation2] sm:$0xff]
    %v41 = vld [vmem:[#allocation2 + $0x8] sm:$0xff]
    %v42 = vld [vmem:[#allocation2 + $0x10] sm:$0xff]
    %v43 = vld [vmem:[#allocation2 + $0x18] sm:$0xff]
    %v44 = vld [vmem:[#allocation5] sm:$0xff]
    %v45 = vld [vmem:[#allocation5 + $0x8] sm:$0xff]
    %v46 = vld [vmem:[#allocation5 + $0x10] sm:$0xff]
    %v47 = vld [vmem:[#allocation5 + $0x18] sm:$0xff]
    %v48 = vsub.f32 %v40, %v44
    %v49 = vsub.f32 %v41, %v45
    %v50 = vsub.f32 %v42, %v46
    %v51 = vsub.f32 %v43, %v47
    %v52 = vmul.f32 %v48, %v48
    %v53 = vmul.f32 %v49, %v49
    %v54 = vmul.f32 %v50, %v50
    %v55 = vmul.f32 %v51, %v51
    %v56 = vadd.f32 %v52, %v53
    %v57 = vadd.f32 %v56, %v54
    %v58 = vadd.f32 %v57, %v55
    %59 = vadd.xlane.f32.xlu0 %v58
    %v60 = vpop.xlane.xlu0 %59
    %v61 = vrot.slane %v60, 4
    %v62 = vadd.f32 %v60, %v61
    %v63 = vrot.slane %v62, 2
    %v64 = vadd.f32 %v62, %v63
    %v65 = vrot.slane %v64, 1
    %v66 = vadd.f32 %v64, %v65
    %s67 = vtos %v66
    %v68 = vstv %s67
    %69 = vst [vmem:[#allocation7] sm:$0xff] %v68
    // Predicated region
    $region18: #{tpu_custom_call.1} parent=1 // pred_check
      _
    $region19: #{tpu_custom_call.1} parent=1 // pred_check_branch
      %71 = sbr.rel (0) target = $region21
    $region20: #{tpu_custom_call.1} parent=1 // pred_region
      %73 = vsyncadd [#allocation4], 0
      %s75 = sshll.u32 [#allocation7], 4
      %s76 = int_to_ptr.vmem [resolvable:$true] %s75
      %s77 = sshll.u32 %s2, 4
      %s78 = int_to_ptr.hbm [resolvable:$true] %s77
      %80 = dma.vmem_to_hbm [thread:$0]  %s76, 128, %s78, [#allocation4]
    $region21: #{tpu_custom_call.1} parent=1 // pred_fallthru
      _
    // Predicated region
    $region22: #{tpu_custom_call.1} parent=1 // pred_check
      _
    $region23: #{tpu_custom_call.1} parent=1 // pred_check_branch
      %82 = sbr.rel (0) target = $region25
    $region24: #{tpu_custom_call.1} parent=1 // pred_region
      %84 = dma.done [#allocation4], 128
    $region25: #{tpu_custom_call.1} parent=1 // pred_fallthru
      _
    %85 = vsyncpa [#allocation3], 1
    %86 = vsyncpa [#allocation6], 1
    %87 = vsyncpa [#allocation4], 1

</llo_original>
